<compile_context>
chip_gen: v7x
topology: tpu7x:2x2x1
jax: 0.10.0
libtpu: 0.0.40
codegen_flags: <defaults>
</compile_context>

<pallas_src>
import functools

import jax
import jax.numpy as jnp
from jax.experimental import pallas as pl
from jax.experimental.pallas import tpu as pltpu


def ensemble_kernel(x_ref, w1_ref, b1_ref, w2_ref, b2_ref, o_ref, *,
                    num_members, hidden, out_dim):
    """One B-tile: fused layer-1 over all members, per-member layer-2.

    x_ref  : [TB, D]     matmul dtype (bf16 or f32)
    w1_ref : [D, E*H]    member e occupies columns e*H:(e+1)*H
    b1_ref : [1, E*H]    f32
    w2_ref : [E*H, O]    member e occupies rows    e*H:(e+1)*H
    b2_ref : [1, E*O]    f32
    o_ref  : [TB, E*O]   member e occupies columns e*O:(e+1)*O
    """
    # Layer 1: all E members in a single MXU pass, f32 accumulation.
    h = jnp.dot(x_ref[...], w1_ref[...], preferred_element_type=jnp.float32)
    h = jnp.maximum(h + b1_ref[...], 0.0)          # bias + ReLU in f32 (VPU)
    hm = h.astype(w2_ref.dtype)                    # back to matmul dtype for MXU

    # Layer 2: per member (linear in E, no block-diagonal E^2 weight blowup).
    for e in range(num_members):
        he = hm[:, e * hidden:(e + 1) * hidden]      # [TB, H]
        we = w2_ref[e * hidden:(e + 1) * hidden, :]  # [H, O]
        oe = jnp.dot(he, we, preferred_element_type=jnp.float32)
        oe = oe + b2_ref[:, e * out_dim:(e + 1) * out_dim]
        o_ref[:, e * out_dim:(e + 1) * out_dim] = oe.astype(o_ref.dtype)


def pack_ensemble_params(w1, b1, w2, b2, matmul_dtype=jnp.bfloat16):
    """One-time weight repacking (call at parameter setup, NOT per forward).

    w1: [E, D, H], b1: [E, H], w2: [E, H, O], b2: [E, O]
    """
    E, D, H = w1.shape
    _, _, O = w2.shape
    return dict(
        # Member e occupies columns e*H:(e+1)*H.
        w1cat=jnp.transpose(w1, (1, 0, 2)).reshape(D, E * H).astype(matmul_dtype),
        b1cat=b1.reshape(1, E * H).astype(jnp.float32),
        # Contiguous stack: member e occupies rows e*H:(e+1)*H (no block-diag).
        w2stk=w2.reshape(E * H, O).astype(matmul_dtype),
        b2cat=b2.reshape(1, E * O).astype(jnp.float32),
    )


def ensemble_forward(x, packed, *, tile_b=None):
    """x: [B, D] -> stacked ensemble output [E, B, O]."""
    w1cat, b1cat = packed["w1cat"], packed["b1cat"]
    w2stk, b2cat = packed["w2stk"], packed["b2cat"]

    D = w1cat.shape[0]
    O = w2stk.shape[1]
    E = b2cat.shape[1] // O
    H = w1cat.shape[1] // E
    B = x.shape[0]

    # B-tiling: largest tile that comfortably fits VMEM with double-buffering.
    if tile_b is None:
        tile_b = B if B <= 512 else 512
    Bp = pl.cdiv(B, tile_b) * tile_b
    xp = x if Bp == B else jnp.pad(x, ((0, Bp - B), (0, 0)))
    xin = xp.astype(w1cat.dtype)                   # bf16 (or f32) MXU inputs

    kernel = functools.partial(
        ensemble_kernel, num_members=E, hidden=H, out_dim=O)

    out_flat = pl.pallas_call(
        kernel,
        out_shape=jax.ShapeDtypeStruct((Bp, E * O), x.dtype),
        grid=(Bp // tile_b,),
        in_specs=[
            pl.BlockSpec((tile_b, D), lambda i: (i, 0)),      # x tile
            pl.BlockSpec((D, E * H), lambda i: (0, 0)),       # w1 (resident)
            pl.BlockSpec((1, E * H), lambda i: (0, 0)),       # b1 (resident)
            pl.BlockSpec((E * H, O), lambda i: (0, 0)),       # w2 (resident)
            pl.BlockSpec((1, E * O), lambda i: (0, 0)),       # b2 (resident)
        ],
        out_specs=pl.BlockSpec((tile_b, E * O), lambda i: (i, 0)),
        compiler_params=pltpu.CompilerParams(
            dimension_semantics=("parallel",)),               # shards B tiles on v7x
    )(xin, w1cat, b1cat, w2stk, b2cat)

    # [B, E*O] -> [E, B, O]  (torch.stack layout of the PyTorch module).
    out_flat = out_flat[:B]
    return jnp.transpose(out_flat.reshape(B, E, O), (1, 0, 2))


def reference_forward(x, w1, b1, w2, b2):
    # Pure-JAX (f32) reference of the stacked ensemble forward.
    h = jnp.maximum(jnp.einsum("bd,edh->ebh", x, w1) + b1[:, None, :], 0.0)
    return jnp.einsum("ebh,eho->ebo", h, w2) + b2[:, None, :]


if __name__ == "__main__":
    E, B, D, H, O = 4, 16, 32, 64, 16

    key = jax.random.PRNGKey(0)
    kx, kw1, kb1, kw2, kb2 = jax.random.split(key, 5)

    x = jax.random.normal(kx, (B, D), dtype=jnp.float32)
    # Deterministic "nn.Linear"-like init for each ensemble member.
    w1 = jax.random.uniform(kw1, (E, D, H), jnp.float32, -1.0, 1.0) / jnp.sqrt(D)
    b1 = jax.random.uniform(kb1, (E, H), jnp.float32, -1.0, 1.0) / jnp.sqrt(D)
    w2 = jax.random.uniform(kw2, (E, H, O), jnp.float32, -1.0, 1.0) / jnp.sqrt(H)
    b2 = jax.random.uniform(kb2, (E, O), jnp.float32, -1.0, 1.0) / jnp.sqrt(H)

    ref = jax.block_until_ready(reference_forward(x, w1, b1, w2, b2))

    # One-time packing (hoisted out of the forward path).
    packed_f32 = pack_ensemble_params(w1, b1, w2, b2, matmul_dtype=jnp.float32)
    packed_bf16 = pack_ensemble_params(w1, b1, w2, b2, matmul_dtype=jnp.bfloat16)

    # Exercise the B-tiled grid (2 tiles of 8 rows) in both precisions.
    out_f32 = jax.block_until_ready(ensemble_forward(x, packed_f32, tile_b=8))
    out_bf16 = jax.block_until_ready(ensemble_forward(x, packed_bf16, tile_b=8))

    assert out_f32.shape == (E, B, O), out_f32.shape
    assert out_bf16.shape == (E, B, O), out_bf16.shape
    assert jnp.allclose(out_f32, ref, atol=1e-5, rtol=1e-5)
    assert jnp.allclose(out_bf16, ref, atol=5e-2, rtol=5e-2)
    print("KERNEL_OK")
</pallas_src>

<mosaic_0001>
module attributes {stable_mosaic.version = 11 : i64} {
  func.func @ensemble_kernel(%arg0: i32, %arg1: memref<8x32xf32, #tpu.memory_space<vmem>>, %arg2: memref<32x256xf32, #tpu.memory_space<vmem>>, %arg3: memref<1x256xf32, #tpu.memory_space<vmem>>, %arg4: memref<256x16xf32, #tpu.memory_space<vmem>>, %arg5: memref<1x64xf32, #tpu.memory_space<vmem>>, %arg6: memref<8x64xf32, #tpu.memory_space<vmem>>) attributes {dimension_semantics = [#tpu.dimension_semantics<parallel>], iteration_bounds = array<i64: 2>, scalar_prefetch = 0 : i64, scratch_operands = 0 : i64, tpu.core_type = #tpu.core_type<tc>, window_params = [{transform_indices = @transform_0, window_bounds = array<i64: 8, 32>}, {pipeline_mode = #tpu.pipeline_mode<synchronous>, transform_indices = @transform_1, window_bounds = array<i64: 32, 256>}, {pipeline_mode = #tpu.pipeline_mode<synchronous>, transform_indices = @transform_2, window_bounds = array<i64: 1, 256>}, {pipeline_mode = #tpu.pipeline_mode<synchronous>, transform_indices = @transform_3, window_bounds = array<i64: 256, 16>}, {pipeline_mode = #tpu.pipeline_mode<synchronous>, transform_indices = @transform_4, window_bounds = array<i64: 1, 64>}, {transform_indices = @transform_5, window_bounds = array<i64: 8, 64>}]} {
    %c0 = arith.constant 0 : index
    %c0_0 = arith.constant 0 : index
    %0 = vector.load %arg1[%c0, %c0_0] : memref<8x32xf32, #tpu.memory_space<vmem>>, vector<8x32xf32>
    %c0_1 = arith.constant 0 : index
    %c0_2 = arith.constant 0 : index
    %1 = vector.load %arg2[%c0_1, %c0_2] : memref<32x256xf32, #tpu.memory_space<vmem>>, vector<32x256xf32>
    %cst = arith.constant dense<0.000000e+00> : vector<8x256xf32>
    %2 = tpu.matmul %0, %1, %cst {dimension_numbers = #tpu.dot_dimension_numbers<[1], [0], [0], [1], [0, 0, 1, 1], [], []>} : vector<8x32xf32>, vector<32x256xf32>, vector<8x256xf32> -> vector<8x256xf32>
    %c0_3 = arith.constant 0 : index
    %c0_4 = arith.constant 0 : index
    %3 = vector.load %arg3[%c0_3, %c0_4] : memref<1x256xf32, #tpu.memory_space<vmem>>, vector<1x256xf32>
    %4 = vector.broadcast %3 : vector<1x256xf32> to vector<8x256xf32>
    %5 = arith.addf %2, %4 : vector<8x256xf32>
    %cst_5 = arith.constant 0.000000e+00 : f32
    %6 = vector.broadcast %cst_5 : f32 to vector<8x256xf32>
    %7 = arith.maximumf %5, %6 : vector<8x256xf32>
    %8 = vector.extract_strided_slice %7 {offsets = [0, 0], sizes = [8, 64], strides = [1, 1]} : vector<8x256xf32> to vector<8x64xf32>
    %c0_6 = arith.constant 0 : index
    %c0_7 = arith.constant 0 : index
    %9 = vector.load %arg4[%c0_6, %c0_7] : memref<256x16xf32, #tpu.memory_space<vmem>>, vector<64x16xf32>
    %cst_8 = arith.constant dense<0.000000e+00> : vector<8x16xf32>
    %10 = tpu.matmul %8, %9, %cst_8 {dimension_numbers = #tpu.dot_dimension_numbers<[1], [0], [0], [1], [0, 0, 1, 1], [], []>} : vector<8x64xf32>, vector<64x16xf32>, vector<8x16xf32> -> vector<8x16xf32>
    %c0_9 = arith.constant 0 : index
    %c0_10 = arith.constant 0 : index
    %11 = vector.load %arg5[%c0_9, %c0_10] : memref<1x64xf32, #tpu.memory_space<vmem>>, vector<1x16xf32>
    %12 = vector.broadcast %11 : vector<1x16xf32> to vector<8x16xf32>
    %13 = arith.addf %10, %12 : vector<8x16xf32>
    %c0_11 = arith.constant 0 : index
    %c0_12 = arith.constant 0 : index
    %14 = vector.load %arg6[%c0_11, %c0_12] : memref<8x64xf32, #tpu.memory_space<vmem>>, vector<8x16xf32>
    tpu.vector_store %arg6[%c0_11, %c0_12], %13 {strides = array<i32>} : memref<8x64xf32, #tpu.memory_space<vmem>>, vector<8x16xf32>,
    %15 = vector.extract_strided_slice %7 {offsets = [0, 64], sizes = [8, 64], strides = [1, 1]} : vector<8x256xf32> to vector<8x64xf32>
    %c64 = arith.constant 64 : index
    %c0_13 = arith.constant 0 : index
    %16 = vector.load %arg4[%c64, %c0_13] : memref<256x16xf32, #tpu.memory_space<vmem>>, vector<64x16xf32>
    %cst_14 = arith.constant dense<0.000000e+00> : vector<8x16xf32>
    %17 = tpu.matmul %15, %16, %cst_14 {dimension_numbers = #tpu.dot_dimension_numbers<[1], [0], [0], [1], [0, 0, 1, 1], [], []>} : vector<8x64xf32>, vector<64x16xf32>, vector<8x16xf32> -> vector<8x16xf32>
    %c0_15 = arith.constant 0 : index
    %c16 = arith.constant 16 : index
    %18 = vector.load %arg5[%c0_15, %c16] : memref<1x64xf32, #tpu.memory_space<vmem>>, vector<1x16xf32>
    %19 = vector.broadcast %18 : vector<1x16xf32> to vector<8x16xf32>
    %20 = arith.addf %17, %19 : vector<8x16xf32>
    %c0_16 = arith.constant 0 : index
    %c16_17 = arith.constant 16 : index
    %21 = vector.load %arg6[%c0_16, %c16_17] : memref<8x64xf32, #tpu.memory_space<vmem>>, vector<8x16xf32>
    tpu.vector_store %arg6[%c0_16, %c16_17], %20 {strides = array<i32>} : memref<8x64xf32, #tpu.memory_space<vmem>>, vector<8x16xf32>,
    %22 = vector.extract_strided_slice %7 {offsets = [0, 128], sizes = [8, 64], strides = [1, 1]} : vector<8x256xf32> to vector<8x64xf32>
    %c128 = arith.constant 128 : index
    %c0_18 = arith.constant 0 : index
    %23 = vector.load %arg4[%c128, %c0_18] : memref<256x16xf32, #tpu.memory_space<vmem>>, vector<64x16xf32>
    %cst_19 = arith.constant dense<0.000000e+00> : vector<8x16xf32>
    %24 = tpu.matmul %22, %23, %cst_19 {dimension_numbers = #tpu.dot_dimension_numbers<[1], [0], [0], [1], [0, 0, 1, 1], [], []>} : vector<8x64xf32>, vector<64x16xf32>, vector<8x16xf32> -> vector<8x16xf32>
    %c0_20 = arith.constant 0 : index
    %c32 = arith.constant 32 : index
    %25 = vector.load %arg5[%c0_20, %c32] : memref<1x64xf32, #tpu.memory_space<vmem>>, vector<1x16xf32>
    %26 = vector.broadcast %25 : vector<1x16xf32> to vector<8x16xf32>
    %27 = arith.addf %24, %26 : vector<8x16xf32>
    %c0_21 = arith.constant 0 : index
    %c32_22 = arith.constant 32 : index
    %28 = vector.load %arg6[%c0_21, %c32_22] : memref<8x64xf32, #tpu.memory_space<vmem>>, vector<8x16xf32>
    tpu.vector_store %arg6[%c0_21, %c32_22], %27 {strides = array<i32>} : memref<8x64xf32, #tpu.memory_space<vmem>>, vector<8x16xf32>,
    %29 = vector.extract_strided_slice %7 {offsets = [0, 192], sizes = [8, 64], strides = [1, 1]} : vector<8x256xf32> to vector<8x64xf32>
    %c192 = arith.constant 192 : index
    %c0_23 = arith.constant 0 : index
    %30 = vector.load %arg4[%c192, %c0_23] : memref<256x16xf32, #tpu.memory_space<vmem>>, vector<64x16xf32>
    %cst_24 = arith.constant dense<0.000000e+00> : vector<8x16xf32>
    %31 = tpu.matmul %29, %30, %cst_24 {dimension_numbers = #tpu.dot_dimension_numbers<[1], [0], [0], [1], [0, 0, 1, 1], [], []>} : vector<8x64xf32>, vector<64x16xf32>, vector<8x16xf32> -> vector<8x16xf32>
    %c0_25 = arith.constant 0 : index
    %c48 = arith.constant 48 : index
    %32 = vector.load %arg5[%c0_25, %c48] : memref<1x64xf32, #tpu.memory_space<vmem>>, vector<1x16xf32>
    %33 = vector.broadcast %32 : vector<1x16xf32> to vector<8x16xf32>
    %34 = arith.addf %31, %33 : vector<8x16xf32>
    %c0_26 = arith.constant 0 : index
    %c48_27 = arith.constant 48 : index
    %35 = vector.load %arg6[%c0_26, %c48_27] : memref<8x64xf32, #tpu.memory_space<vmem>>, vector<8x16xf32>
    tpu.vector_store %arg6[%c0_26, %c48_27], %34 {strides = array<i32>} : memref<8x64xf32, #tpu.memory_space<vmem>>, vector<8x16xf32>,
    return
  }
  func.func @transform_0(%arg0: i32) -> (i32, i32) {
    %c0_i32 = arith.constant 0 : i32
    %c0_i32_0 = arith.constant 0 : i32
    return %arg0, %c0_i32 : i32, i32
  }
  func.func @transform_1(%arg0: i32) -> (i32, i32) {
    %c0_i32 = arith.constant 0 : i32
    %c0_i32_0 = arith.constant 0 : i32
    %c0_i32_1 = arith.constant 0 : i32
    return %c0_i32, %c0_i32_0 : i32, i32
  }
  func.func @transform_2(%arg0: i32) -> (i32, i32) {
    %c0_i32 = arith.constant 0 : i32
    %c0_i32_0 = arith.constant 0 : i32
    %c0_i32_1 = arith.constant 0 : i32
    return %c0_i32, %c0_i32_0 : i32, i32
  }
  func.func @transform_3(%arg0: i32) -> (i32, i32) {
    %c0_i32 = arith.constant 0 : i32
    %c0_i32_0 = arith.constant 0 : i32
    %c0_i32_1 = arith.constant 0 : i32
    return %c0_i32, %c0_i32_0 : i32, i32
  }
  func.func @transform_4(%arg0: i32) -> (i32, i32) {
    %c0_i32 = arith.constant 0 : i32
    %c0_i32_0 = arith.constant 0 : i32
    %c0_i32_1 = arith.constant 0 : i32
    return %c0_i32, %c0_i32_0 : i32, i32
  }
  func.func @transform_5(%arg0: i32) -> (i32, i32) {
    %c0_i32 = arith.constant 0 : i32
    %c0_i32_0 = arith.constant 0 : i32
    return %arg0, %c0_i32 : i32, i32
  }
}

</mosaic_0001>

<llo_original>
// kernel: tpu_custom_call.1
$region0: #{tpu_custom_call.1}
  #allocation0 [shape = 'u32[]', space=smem, size = 0x4, offset = 0x4, fixed_abs, tag = 'smem constant byte address 0x4 - core index']
  #allocation1 [shape = 'u32[144,128]{1,0:T(1,128)}', space=vmem, size = 0x12000, scoped, tag = 'internal scratch']
  %s0 = inlined_call_operand.vmem [shape: f32[16,32], index: 0, kind: input, shape index: {}]
  %s1 = inlined_call_operand.vmem [shape: f32[32,256], index: 1, kind: input, shape index: {}]
  %s2 = inlined_call_operand.vmem [shape: f32[1,256], index: 2, kind: input, shape index: {}]
  %s3 = inlined_call_operand.vmem [shape: f32[256,16], index: 3, kind: input, shape index: {}]
  %s4 = inlined_call_operand.vmem [shape: f32[1,64], index: 4, kind: input, shape index: {}]
  %s5 = inlined_call_operand.hbm [shape: f32[16,64], index: 5, kind: output, shape index: {}]
  %s6 = sld [smem:[#allocation0]]
  $region53: #{tpu_custom_call.1} parent=0
    _
  %s8 = ssub.s32 1, %s6
  %s9 = scalar_select 0, %s8, %s6
  $region1: #{tpu_custom_call.1} parent=0
    #allocation2 [shape = 'u8[8192]{0}', space=vmem, size = 0x2000, scoped, tag = 'output window, operand 0']
    #allocation3 [shape = 's32[2]{0}', space=sflag, size = 0x8, scoped, tag = 'scoped memory for tpu_custom_call.1']
    %10 = vsyncpa [#allocation3], 0
    %s11 = scalar_lea.sflag [#allocation3], 1
    %12 = vsyncpa %s11, 0
    loop: start=0, step=1, limit=4
    $region2: #{tpu_custom_call.1} parent=1 // loop_pre_header
      _
    $region3: #{tpu_custom_call.1} parent=1 // loop_header
      %s14 = sphi 0, %s18
      %p15 = scmp.ge.s32.totalorder %s14, 4
      %s24 = sphi 0, %s26
      %s27 = sphi 0, %s24
      %s28 = sphi 0, %s27
      %s44 = sphi 0, %s28
      %s48 = sphi 0, %s48
      %s50 = sphi 0, %s48
      %s51 = sphi 0, %s50
      %s65 = sphi 0, %s51
      %s69 = sphi 0, %s69
      %s71 = sphi 0, %s69
      %s72 = sphi 0, %s71
      %s86 = sphi 0, %s72
      %s90 = sphi 0, %s90
      %s92 = sphi 0, %s90
      %s93 = sphi 0, %s92
      %s107 = sphi 0, %s93
      %s111 = sphi 0, %s111
      %s113 = sphi 0, %s111
      %s114 = sphi 0, %s113
      %s128 = sphi 0, %s114
      %s134 = sphi 0, %s136
      %s137 = sphi 0, %s134
      %s138 = sphi 0, %s137
      %s154 = sphi 0, %s138
    $region4: #{tpu_custom_call.1} parent=1 // loop_header_branch
      %17 = sbr.rel (%p15) target = $region8
    $region5: #{tpu_custom_call.1} parent=1 // loop_body
      %s19 = ssub.s32 %s14, 1
      %s20 = ssub.s32 %s14, 2
      %s21 = sadd.s32 %s14, 1
      %s22 = ssub.s32 %s14, %s21
      %p23 = scmp.eq.s32.totalorder %s22, 0
      %s25 = sadd.s32 %s24, 1
      %s26 = scalar_select %p23, %s24, %s25
      %p29 = pneg %p23
      %p30 = scmp.eq.s32.totalorder %s14, 1
      %p31 = por %p29, %p30
      %p32 = scmp.ne.s32.totalorder %s24, %s27
      %p33 = scmp.eq.s32.totalorder %s14, 0
      %p34 = por %p32, %p33
      %p35 = scmp.ne.s32.totalorder %s24, %s27
      %p36 = scmp.eq.s32.totalorder %s19, 1
      %p37 = por %p35, %p36
      %p38 = scmp.ne.s32.totalorder %s27, %s28
      %p39 = scmp.eq.s32.totalorder %s19, 0
      %p40 = por %p38, %p39
      %p41 = scmp.ne.s32.totalorder %s27, %s28
      %p42 = scmp.eq.s32.totalorder %s20, 1
      %p43 = por %p41, %p42
      %p45 = scmp.ne.s32.totalorder %s28, %s44
      %p46 = scmp.eq.s32.totalorder %s20, 0
      %p47 = por %p45, %p46
      %s49 = sadd.s32 %s48, 1
      %p52 = scmp.eq.s32.totalorder %s14, 1
      %p53 = scmp.ne.s32.totalorder %s48, %s50
      %p54 = scmp.eq.s32.totalorder %s14, 0
      %p55 = por %p53, %p54
      %p56 = scmp.ne.s32.totalorder %s48, %s50
      %p57 = scmp.eq.s32.totalorder %s19, 1
      %p58 = por %p56, %p57
      %p59 = scmp.ne.s32.totalorder %s50, %s51
      %p60 = scmp.eq.s32.totalorder %s19, 0
      %p61 = por %p59, %p60
      %p62 = scmp.ne.s32.totalorder %s50, %s51
      %p63 = scmp.eq.s32.totalorder %s20, 1
      %p64 = por %p62, %p63
      %p66 = scmp.ne.s32.totalorder %s51, %s65
      %p67 = scmp.eq.s32.totalorder %s20, 0
      %p68 = por %p66, %p67
      %s70 = sadd.s32 %s69, 1
      %p73 = scmp.eq.s32.totalorder %s14, 1
      %p74 = scmp.ne.s32.totalorder %s69, %s71
      %p75 = scmp.eq.s32.totalorder %s14, 0
      %p76 = por %p74, %p75
      %p77 = scmp.ne.s32.totalorder %s69, %s71
      %p78 = scmp.eq.s32.totalorder %s19, 1
      %p79 = por %p77, %p78
      %p80 = scmp.ne.s32.totalorder %s71, %s72
      %p81 = scmp.eq.s32.totalorder %s19, 0
      %p82 = por %p80, %p81
      %p83 = scmp.ne.s32.totalorder %s71, %s72
      %p84 = scmp.eq.s32.totalorder %s20, 1
      %p85 = por %p83, %p84
      %p87 = scmp.ne.s32.totalorder %s72, %s86
      %p88 = scmp.eq.s32.totalorder %s20, 0
      %p89 = por %p87, %p88
      %s91 = sadd.s32 %s90, 1
      %p94 = scmp.eq.s32.totalorder %s14, 1
      %p95 = scmp.ne.s32.totalorder %s90, %s92
      %p96 = scmp.eq.s32.totalorder %s14, 0
      %p97 = por %p95, %p96
      %p98 = scmp.ne.s32.totalorder %s90, %s92
      %p99 = scmp.eq.s32.totalorder %s19, 1
      %p100 = por %p98, %p99
      %p101 = scmp.ne.s32.totalorder %s92, %s93
      %p102 = scmp.eq.s32.totalorder %s19, 0
      %p103 = por %p101, %p102
      %p104 = scmp.ne.s32.totalorder %s92, %s93
      %p105 = scmp.eq.s32.totalorder %s20, 1
      %p106 = por %p104, %p105
      %p108 = scmp.ne.s32.totalorder %s93, %s107
      %p109 = scmp.eq.s32.totalorder %s20, 0
      %p110 = por %p108, %p109
      %s112 = sadd.s32 %s111, 1
      %p115 = scmp.eq.s32.totalorder %s14, 1
      %p116 = scmp.ne.s32.totalorder %s111, %s113
      %p117 = scmp.eq.s32.totalorder %s14, 0
      %p118 = por %p116, %p117
      %p119 = scmp.ne.s32.totalorder %s111, %s113
      %p120 = scmp.eq.s32.totalorder %s19, 1
      %p121 = por %p119, %p120
      %p122 = scmp.ne.s32.totalorder %s113, %s114
      %p123 = scmp.eq.s32.totalorder %s19, 0
      %p124 = por %p122, %p123
      %p125 = scmp.ne.s32.totalorder %s113, %s114
      %p126 = scmp.eq.s32.totalorder %s20, 1
      %p127 = por %p125, %p126
      %p129 = scmp.ne.s32.totalorder %s114, %s128
      %p130 = scmp.eq.s32.totalorder %s20, 0
      %p131 = por %p129, %p130
      %s132 = ssub.s32 %s14, %s21
      %p133 = scmp.eq.s32.totalorder %s132, 0
      %s135 = sadd.s32 %s134, 1
      %s136 = scalar_select %p133, %s134, %s135
      %p139 = pneg %p133
      %p140 = scmp.eq.s32.totalorder %s14, 1
      %p141 = por %p139, %p140
      %p142 = scmp.ne.s32.totalorder %s134, %s137
      %p143 = scmp.eq.s32.totalorder %s14, 0
      %p144 = por %p142, %p143
      %p145 = scmp.ne.s32.totalorder %s134, %s137
      %p146 = scmp.eq.s32.totalorder %s19, 1
      %p147 = por %p145, %p146
      %p148 = scmp.ne.s32.totalorder %s137, %s138
      %p149 = scmp.eq.s32.totalorder %s19, 0
      %p150 = por %p148, %p149
      %p151 = scmp.ne.s32.totalorder %s137, %s138
      %p152 = scmp.eq.s32.totalorder %s20, 1
      %p153 = por %p151, %p152
      %p155 = scmp.ne.s32.totalorder %s138, %s154
      %p156 = scmp.eq.s32.totalorder %s20, 0
      %p157 = por %p155, %p156
      %p158 = scmp.le.s32.totalorder 1, %s14
      %p159 = scmp.lt.s32.totalorder %s14, 3
      %p160 = pnand %p158, %p159
      %p161 = pneg %p160
      // Predicated region
      $region9: #{tpu_custom_call.1} parent=5 // pred_check
        _
      $region10: #{tpu_custom_call.1} parent=5 // pred_check_branch
        %163 = sbr.rel (%p160) target = $region12
      $region11: #{tpu_custom_call.1} parent=5 // pred_region
        %s164 = ssub.s32 %s14, 1
        // Predicated region
        $region13: #{tpu_custom_call.1} parent=11 // pred_check
          %p165 = pneg %p61
        $region14: #{tpu_custom_call.1} parent=11 // pred_check_branch
          %167 = sbr.rel (%p165) target = $region16
        $region15: #{tpu_custom_call.1} parent=11 // pred_region
          _
        $region16: #{tpu_custom_call.1} parent=11 // pred_fallthru
          _
        // Predicated region
        $region17: #{tpu_custom_call.1} parent=11 // pred_check
          %p168 = pneg %p82
        $region18: #{tpu_custom_call.1} parent=11 // pred_check_branch
          %170 = sbr.rel (%p168) target = $region20
        $region19: #{tpu_custom_call.1} parent=11 // pred_region
          _
        $region20: #{tpu_custom_call.1} parent=11 // pred_fallthru
          _
        // Predicated region
        $region21: #{tpu_custom_call.1} parent=11 // pred_check
          %p171 = pneg %p103
        $region22: #{tpu_custom_call.1} parent=11 // pred_check_branch
          %173 = sbr.rel (%p171) target = $region24
        $region23: #{tpu_custom_call.1} parent=11 // pred_region
          _
        $region24: #{tpu_custom_call.1} parent=11 // pred_fallthru
          _
        // Predicated region
        $region25: #{tpu_custom_call.1} parent=11 // pred_check
          %p174 = pneg %p124
        $region26: #{tpu_custom_call.1} parent=11 // pred_check_branch
          %176 = sbr.rel (%p174) target = $region28
        $region27: #{tpu_custom_call.1} parent=11 // pred_region
          _
        $region28: #{tpu_custom_call.1} parent=11 // pred_fallthru
          _
      $region12: #{tpu_custom_call.1} parent=5 // pred_fallthru
        _
      %p177 = scmp.lt.s32.totalorder %s14, 2
      // Predicated region
      $region29: #{tpu_custom_call.1} parent=5 // pred_check
        %p178 = pneg %p177
      $region30: #{tpu_custom_call.1} parent=5 // pred_check_branch
        %180 = sbr.rel (%p178) target = $region32
      $region31: #{tpu_custom_call.1} parent=5 // pred_region
        // Predicated region
        $region33: #{tpu_custom_call.1} parent=31 // pred_check
          %p181 = pneg %p34
        $region34: #{tpu_custom_call.1} parent=31 // pred_check_branch
          %183 = sbr.rel (%p181) target = $region36
        $region35: #{tpu_custom_call.1} parent=31 // pred_region
          %p184 = scmp.lt.s32.totalorder %s14, 1
          %s185 = scalar_select %p184, %s14, 1
          %s186 = smul.addr %s185, 8
          %s187 = scalar_lea.vmem %s0, %s186
        $region36: #{tpu_custom_call.1} parent=31 // pred_fallthru
          _
      $region32: #{tpu_custom_call.1} parent=5 // pred_fallthru
        _
      %p188 = scmp.le.s32.totalorder 1, %s14
      %p189 = scmp.lt.s32.totalorder %s14, 3
      %p190 = pnand %p188, %p189
      %p191 = pneg %p190
      // Predicated region
      $region37: #{tpu_custom_call.1} parent=5 // pred_check
        _
      $region38: #{tpu_custom_call.1} parent=5 // pred_check_branch
        %193 = sbr.rel (%p190) target = $region40
      $region39: #{tpu_custom_call.1} parent=5 // pred_region
        %s194 = ssub.s32 %s14, 1
        %p195 = scmp.lt.s32.totalorder %s19, 1
        %s196 = scalar_select %p195, %s19, 1
        %s197 = smul.addr %s196, 8
        %s198 = scalar_lea.vmem %s0, %s197
        %p199 = pneg %p40
        %p200 = pneg %p37
        %p201 = pneg %p61
        %p202 = pneg %p58
        %p203 = pneg %p82
        %p204 = pneg %p79
        %p205 = pneg %p103
        %p206 = pneg %p100
        %p207 = pneg %p124
        %p208 = pneg %p121
        %p209 = pneg %p150
        %p210 = pneg %p147
        %s211 = sand.u32 %s137, 1
        %s212 = scalar_lea.sflag [#allocation3], %s211
        %s213 = sand.u32 %s137, 1
        %s214 = smul.addr %s213, 8
        %s215 = scalar_lea.vmem [#allocation2], %s214
        %p216 = scmp.lt.s32.totalorder %s19, 1
        %s217 = scalar_select %p216, %s19, 1
        %s218 = smul.addr %s217, 8
        %s219 = scalar_lea.vmem %s0, %s218
        %v220 = vld [vmem:[%s219] sm:$0xff]
        %v221 = vld [vmem:[%s1] sm:$0xff]
        %v222 = vld [vmem:[%s1 + $0x8] sm:$0xff]
        %v223 = vld [vmem:[%s1 + $0x10] sm:$0xff]
        %v224 = vld [vmem:[%s1 + $0x18] sm:$0xff]
        %v225 = vld [vmem:[%s1 + $0x20] sm:$0xff]
        %v226 = vld [vmem:[%s1 + $0x28] sm:$0xff]
        %v227 = vld [vmem:[%s1 + $0x30] sm:$0xff]
        %v228 = vld [vmem:[%s1 + $0x38] sm:$0xff]
        %v229 = vld [vmem:[%s2] sm:$0x3]
        %v231 = vlaneseq
        %v232 = vshrl.u32 %v231, 7
        %v233 = vsub.s32 0, %v232
        %v234 = vrot.slane %v229, %v233
        %v235 = vlaneseq
        %v236 = vshrl.u32 %v235, 7
        %v237 = vsub.s32 1, %v236
        %v238 = vrot.slane %v229, %v237
        %vm241 = vcmask 261120
        %v243 = vsel %vm241, %v220, 0
        %245 = vmatprep.subr.mxu0 %v222
        %246 = vmatpush1.msra.mxu0 %v221
        %247 = vmatprep.subr.mxu0 %v224
        %248 = vmatpush1.msra.mxu0 %v223
        %249 = vmatprep.subr.mxu0 %v226
        %250 = vmatpush1.msra.mxu0 %v225
        %251 = vmatprep.subr.mxu0 %v228
        %252 = vmatpush1.msra.mxu0 %v227
        %253 = vmatprep.subr.mxu0 0.0
        %254 = vmatpush1.msra.mxu0 0.0
        %255 = vmatprep.subr.mxu0 0.0
        %256 = vmatpush1.msra.mxu0 0.0
        %257 = vmatprep.subr.mxu0 0.0
        %258 = vmatpush1.msra.mxu0 0.0
        %259 = vmatprep.subr.mxu0 0.0
        %260 = vmatpush1.msra.mxu0 0.0
        %261 = vmatprep.subr.mxu0 0.0
        %262 = vmatpush1.msra.mxu0 0.0
        %263 = vmatprep.subr.mxu0 0.0
        %264 = vmatpush1.msra.mxu0 0.0
        %265 = vmatprep.subr.mxu0 0.0
        %266 = vmatpush1.msra.mxu0 0.0
        %267 = vmatprep.subr.mxu0 0.0
        %268 = vmatpush1.msra.mxu0 0.0
        %269 = vmatprep.subr.mxu0 0.0
        %270 = vmatpush1.msra.mxu0 0.0
        %271 = vmatprep.subr.mxu0 0.0
        %272 = vmatpush1.msra.mxu0 0.0
        %273 = vmatprep.subr.mxu0 0.0
        %274 = vmatpush1.msra.mxu0 0.0
        %275 = vmatprep.subr.mxu0 0.0
        %276 = vmatpush1.msra.mxu0 0.0
        %277 = vmatprep.subr.mxu0 0.0
        %278 = vmatpush1.msra.mxu0 0.0
        %279 = vmatprep.subr.mxu0 0.0
        %280 = vmatpush1.msra.mxu0 0.0
        %281 = vmatprep.subr.mxu0 0.0
        %282 = vmatpush1.msra.mxu0 0.0
        %283 = vmatprep.subr.mxu0 0.0
        %284 = vmatpush1.msra.mxu0 0.0
        %285 = vmatprep.subr.mxu0 0.0
        %286 = vmatpush1.msra.mxu0 0.0
        %287 = vmatprep.subr.mxu0 0.0
        %288 = vmatpush1.msra.mxu0 0.0
        %289 = vmatprep.subr.mxu0 0.0
        %290 = vmatpush1.msra.mxu0 0.0
        %291 = vmatprep.subr.mxu0 0.0
        %292 = vmatpush1.msra.mxu0 0.0
        %293 = vmatprep.subr.mxu0 0.0
        %294 = vmatpush1.msra.mxu0 0.0
        %295 = vmatprep.subr.mxu0 0.0
        %296 = vmatpush1.msra.mxu0 0.0
        %297 = vmatprep.subr.mxu0 0.0
        %298 = vmatpush1.msra.mxu0 0.0
        %299 = vmatprep.subr.mxu0 0.0
        %300 = vmatpush1.msra.mxu0 0.0
        %301 = vmatprep.subr.mxu0 0.0
        %302 = vmatpush1.msra.mxu0 0.0
        %303 = vmatprep.subr.mxu0 0.0
        %304 = vmatpush1.msra.mxu0 0.0
        %305 = vmatprep.subr.mxu0 0.0
        %306 = vmatpush1.msra.mxu0 0.0
        %307 = vmatprep.subr.mxu0 0.0
        %308 = vmatpush1.msra.mxu0 0.0
        %309 = vmatprep.mubr.f32.mxu0 0.0
        %310 = vmatmul.mubr.f32.gmra.mrb[0].mxu0 %v243
        %v311 = vpop.f32.mrb[0].mxu0
        %v312 = vadd.f32 %v234, %v311
        %v313 = vpop.f32.mrb[0].mxu0
        %v314 = vadd.f32 %v238, %v313
        %315 = vdwg.mxu0
        %v316 = vmax.f32 %v312, 0.0
        %v317 = vmax.f32 %v314, 0.0
        %v318 = vld [vmem:[%s3] sm:$0xff]
        %v319 = vld [vmem:[%s3 + $0x8] sm:$0xff]
        %v320 = vld [vmem:[%s3 + $0x10] sm:$0xff]
        %v321 = vld [vmem:[%s3 + $0x18] sm:$0xff]
        %v322 = vld [vmem:[%s3 + $0x20] sm:$0xff]
        %v323 = vld [vmem:[%s3 + $0x28] sm:$0xff]
        %v324 = vld [vmem:[%s3 + $0x30] sm:$0xff]
        %v325 = vld [vmem:[%s3 + $0x38] sm:$0xff]
        %v326 = vld [vmem:[%s4] sm:$0x1]
        %v328 = vlaneseq
        %v329 = vshrl.u32 %v328, 7
        %v330 = vsub.s32 0, %v329
        %v331 = vrot.slane %v326, %v330
        %vm333 = vcmask 523264
        %v335 = vsel %vm333, %v316, 0
        %337 = vmatprep.subr.mxu0 0.0
        %338 = vmatpush1.msra.mxu0 %v318
        %339 = vmatprep.subr.mxu0 0.0
        %340 = vmatpush1.msra.mxu0 %v319
        %341 = vmatprep.subr.mxu0 0.0
        %342 = vmatpush1.msra.mxu0 %v320
        %343 = vmatprep.subr.mxu0 0.0
        %344 = vmatpush1.msra.mxu0 %v321
        %345 = vmatprep.subr.mxu0 0.0
        %346 = vmatpush1.msra.mxu0 %v322
        %347 = vmatprep.subr.mxu0 0.0
        %348 = vmatpush1.msra.mxu0 %v323
        %349 = vmatprep.subr.mxu0 0.0
        %350 = vmatpush1.msra.mxu0 %v324
        %351 = vmatprep.subr.mxu0 0.0
        %352 = vmatpush1.msra.mxu0 %v325
        %353 = vmatprep.subr.mxu0 0.0
        %354 = vmatpush1.msra.mxu0 0.0
        %355 = vmatprep.subr.mxu0 0.0
        %356 = vmatpush1.msra.mxu0 0.0
        %357 = vmatprep.subr.mxu0 0.0
        %358 = vmatpush1.msra.mxu0 0.0
        %359 = vmatprep.subr.mxu0 0.0
        %360 = vmatpush1.msra.mxu0 0.0
        %361 = vmatprep.subr.mxu0 0.0
        %362 = vmatpush1.msra.mxu0 0.0
        %363 = vmatprep.subr.mxu0 0.0
        %364 = vmatpush1.msra.mxu0 0.0
        %365 = vmatprep.subr.mxu0 0.0
        %366 = vmatpush1.msra.mxu0 0.0
        %367 = vmatprep.subr.mxu0 0.0
        %368 = vmatpush1.msra.mxu0 0.0
        %369 = vmatprep.subr.mxu0 0.0
        %370 = vmatpush1.msra.mxu0 0.0
        %371 = vmatprep.subr.mxu0 0.0
        %372 = vmatpush1.msra.mxu0 0.0
        %373 = vmatprep.subr.mxu0 0.0
        %374 = vmatpush1.msra.mxu0 0.0
        %375 = vmatprep.subr.mxu0 0.0
        %376 = vmatpush1.msra.mxu0 0.0
        %377 = vmatprep.subr.mxu0 0.0
        %378 = vmatpush1.msra.mxu0 0.0
        %379 = vmatprep.subr.mxu0 0.0
        %380 = vmatpush1.msra.mxu0 0.0
        %381 = vmatprep.subr.mxu0 0.0
        %382 = vmatpush1.msra.mxu0 0.0
        %383 = vmatprep.subr.mxu0 0.0
        %384 = vmatpush1.msra.mxu0 0.0
        %385 = vmatprep.subr.mxu0 0.0
        %386 = vmatpush1.msra.mxu0 0.0
        %387 = vmatprep.subr.mxu0 0.0
        %388 = vmatpush1.msra.mxu0 0.0
        %389 = vmatprep.subr.mxu0 0.0
        %390 = vmatpush1.msra.mxu0 0.0
        %391 = vmatprep.subr.mxu0 0.0
        %392 = vmatpush1.msra.mxu0 0.0
        %393 = vmatprep.subr.mxu0 0.0
        %394 = vmatpush1.msra.mxu0 0.0
        %395 = vmatprep.subr.mxu0 0.0
        %396 = vmatpush1.msra.mxu0 0.0
        %397 = vmatprep.subr.mxu0 0.0
        %398 = vmatpush1.msra.mxu0 0.0
        %399 = vmatprep.subr.mxu0 0.0
        %400 = vmatpush1.msra.mxu0 0.0
        %401 = vmatprep.mubr.f32.mxu0 0.0
        %402 = vmatmul.mubr.f32.gmra.mrb[0].mxu0 %v335
        %v403 = vpop.f32.mrb[0].mxu0
        %v404 = vadd.f32 %v331, %v403
        %v405 = vpop.f32.mrb[0].mxu0
        %406 = vdwg.mxu0
        %vm407 = vcmask 130048
        %408 = vst.msk [vmem:[%s215] sm:$0xff] %vm407, %v404
        %v409 = vld [vmem:[%s3 + $0x40] sm:$0xff]
        %v410 = vld [vmem:[%s3 + $0x48] sm:$0xff]
        %v411 = vld [vmem:[%s3 + $0x50] sm:$0xff]
        %v412 = vld [vmem:[%s3 + $0x58] sm:$0xff]
        %v413 = vld [vmem:[%s3 + $0x60] sm:$0xff]
        %v414 = vld [vmem:[%s3 + $0x68] sm:$0xff]
        %v415 = vld [vmem:[%s3 + $0x70] sm:$0xff]
        %v416 = vld [vmem:[%s3 + $0x78] sm:$0xff]
        %v417 = vld [vmem:[%s4] sm:$0x1]
        %v419 = vlaneseq
        %v420 = vshrl.u32 %v419, 7
        %v421 = vsub.s32 0, %v420
        %v422 = vrot.slane %v417, %v421
        %423 = vrot.lane.b32.xlu0 %v316, 64
        %v424 = vpop.permute.xlu0 %423
        %425 = vrot.lane.b32.xlu0 %v422, 112
        %v426 = vpop.permute.xlu0 %425
        %v428 = vsel %vm333, %v424, 0
        %430 = vmatprep.subr.mxu0 0.0
        %431 = vmatpush1.msra.mxu0 %v409
        %432 = vmatprep.subr.mxu0 0.0
        %433 = vmatpush1.msra.mxu0 %v410
        %434 = vmatprep.subr.mxu0 0.0
        %435 = vmatpush1.msra.mxu0 %v411
        %436 = vmatprep.subr.mxu0 0.0
        %437 = vmatpush1.msra.mxu0 %v412
        %438 = vmatprep.subr.mxu0 0.0
        %439 = vmatpush1.msra.mxu0 %v413
        %440 = vmatprep.subr.mxu0 0.0
        %441 = vmatpush1.msra.mxu0 %v414
        %442 = vmatprep.subr.mxu0 0.0
        %443 = vmatpush1.msra.mxu0 %v415
        %444 = vmatprep.subr.mxu0 0.0
        %445 = vmatpush1.msra.mxu0 %v416
        %446 = vmatprep.subr.mxu0 0.0
        %447 = vmatpush1.msra.mxu0 0.0
        %448 = vmatprep.subr.mxu0 0.0
        %449 = vmatpush1.msra.mxu0 0.0
        %450 = vmatprep.subr.mxu0 0.0
        %451 = vmatpush1.msra.mxu0 0.0
        %452 = vmatprep.subr.mxu0 0.0
        %453 = vmatpush1.msra.mxu0 0.0
        %454 = vmatprep.subr.mxu0 0.0
        %455 = vmatpush1.msra.mxu0 0.0
        %456 = vmatprep.subr.mxu0 0.0
        %457 = vmatpush1.msra.mxu0 0.0
        %458 = vmatprep.subr.mxu0 0.0
        %459 = vmatpush1.msra.mxu0 0.0
        %460 = vmatprep.subr.mxu0 0.0
        %461 = vmatpush1.msra.mxu0 0.0
        %462 = vmatprep.subr.mxu0 0.0
        %463 = vmatpush1.msra.mxu0 0.0
        %464 = vmatprep.subr.mxu0 0.0
        %465 = vmatpush1.msra.mxu0 0.0
        %466 = vmatprep.subr.mxu0 0.0
        %467 = vmatpush1.msra.mxu0 0.0
        %468 = vmatprep.subr.mxu0 0.0
        %469 = vmatpush1.msra.mxu0 0.0
        %470 = vmatprep.subr.mxu0 0.0
        %471 = vmatpush1.msra.mxu0 0.0
        %472 = vmatprep.subr.mxu0 0.0
        %473 = vmatpush1.msra.mxu0 0.0
        %474 = vmatprep.subr.mxu0 0.0
        %475 = vmatpush1.msra.mxu0 0.0
        %476 = vmatprep.subr.mxu0 0.0
        %477 = vmatpush1.msra.mxu0 0.0
        %478 = vmatprep.subr.mxu0 0.0
        %479 = vmatpush1.msra.mxu0 0.0
        %480 = vmatprep.subr.mxu0 0.0
        %481 = vmatpush1.msra.mxu0 0.0
        %482 = vmatprep.subr.mxu0 0.0
        %483 = vmatpush1.msra.mxu0 0.0
        %484 = vmatprep.subr.mxu0 0.0
        %485 = vmatpush1.msra.mxu0 0.0
        %486 = vmatprep.subr.mxu0 0.0
        %487 = vmatpush1.msra.mxu0 0.0
        %488 = vmatprep.subr.mxu0 0.0
        %489 = vmatpush1.msra.mxu0 0.0
        %490 = vmatprep.subr.mxu0 0.0
        %491 = vmatpush1.msra.mxu0 0.0
        %492 = vmatprep.subr.mxu0 0.0
        %493 = vmatpush1.msra.mxu0 0.0
        %494 = vmatprep.mubr.f32.mxu0 0.0
        %495 = vmatmul.mubr.f32.gmra.mrb[0].mxu0 %v428
        %v496 = vpop.f32.mrb[0].mxu0
        %v497 = vadd.f32 %v426, %v496
        %v498 = vpop.f32.mrb[0].mxu0
        %499 = vdwg.mxu0
        %501 = vrot.lane.b32.xlu0 %v497, 16
        %v502 = vpop.permute.xlu0 %501
        %vm504 = vcmask 261248
        %505 = vst.msk [vmem:[%s215] sm:$0xff] %vm504, %v502
        %v506 = vld [vmem:[%s3 + $0x80] sm:$0xff]
        %v507 = vld [vmem:[%s3 + $0x88] sm:$0xff]
        %v508 = vld [vmem:[%s3 + $0x90] sm:$0xff]
        %v509 = vld [vmem:[%s3 + $0x98] sm:$0xff]
        %v510 = vld [vmem:[%s3 + $0xa0] sm:$0xff]
        %v511 = vld [vmem:[%s3 + $0xa8] sm:$0xff]
        %v512 = vld [vmem:[%s3 + $0xb0] sm:$0xff]
        %v513 = vld [vmem:[%s3 + $0xb8] sm:$0xff]
        %v514 = vld [vmem:[%s4] sm:$0x1]
        %v516 = vlaneseq
        %v517 = vshrl.u32 %v516, 7
        %v518 = vsub.s32 0, %v517
        %v519 = vrot.slane %v514, %v518
        %520 = vrot.lane.b32.xlu0 %v519, 96
        %v521 = vpop.permute.xlu0 %520
        %v524 = vsel %vm333, %v317, 0
        %526 = vmatprep.subr.mxu0 0.0
        %527 = vmatpush1.msra.mxu0 %v506
        %528 = vmatprep.subr.mxu0 0.0
        %529 = vmatpush1.msra.mxu0 %v507
        %530 = vmatprep.subr.mxu0 0.0
        %531 = vmatpush1.msra.mxu0 %v508
        %532 = vmatprep.subr.mxu0 0.0
        %533 = vmatpush1.msra.mxu0 %v509
        %534 = vmatprep.subr.mxu0 0.0
        %535 = vmatpush1.msra.mxu0 %v510
        %536 = vmatprep.subr.mxu0 0.0
        %537 = vmatpush1.msra.mxu0 %v511
        %538 = vmatprep.subr.mxu0 0.0
        %539 = vmatpush1.msra.mxu0 %v512
        %540 = vmatprep.subr.mxu0 0.0
        %541 = vmatpush1.msra.mxu0 %v513
        %542 = vmatprep.subr.mxu0 0.0
        %543 = vmatpush1.msra.mxu0 0.0
        %544 = vmatprep.subr.mxu0 0.0
        %545 = vmatpush1.msra.mxu0 0.0
        %546 = vmatprep.subr.mxu0 0.0
        %547 = vmatpush1.msra.mxu0 0.0
        %548 = vmatprep.subr.mxu0 0.0
        %549 = vmatpush1.msra.mxu0 0.0
        %550 = vmatprep.subr.mxu0 0.0
        %551 = vmatpush1.msra.mxu0 0.0
        %552 = vmatprep.subr.mxu0 0.0
        %553 = vmatpush1.msra.mxu0 0.0
        %554 = vmatprep.subr.mxu0 0.0
        %555 = vmatpush1.msra.mxu0 0.0
        %556 = vmatprep.subr.mxu0 0.0
        %557 = vmatpush1.msra.mxu0 0.0
        %558 = vmatprep.subr.mxu0 0.0
        %559 = vmatpush1.msra.mxu0 0.0
        %560 = vmatprep.subr.mxu0 0.0
        %561 = vmatpush1.msra.mxu0 0.0
        %562 = vmatprep.subr.mxu0 0.0
        %563 = vmatpush1.msra.mxu0 0.0
        %564 = vmatprep.subr.mxu0 0.0
        %565 = vmatpush1.msra.mxu0 0.0
        %566 = vmatprep.subr.mxu0 0.0
        %567 = vmatpush1.msra.mxu0 0.0
        %568 = vmatprep.subr.mxu0 0.0
        %569 = vmatpush1.msra.mxu0 0.0
        %570 = vmatprep.subr.mxu0 0.0
        %571 = vmatpush1.msra.mxu0 0.0
        %572 = vmatprep.subr.mxu0 0.0
        %573 = vmatpush1.msra.mxu0 0.0
        %574 = vmatprep.subr.mxu0 0.0
        %575 = vmatpush1.msra.mxu0 0.0
        %576 = vmatprep.subr.mxu0 0.0
        %577 = vmatpush1.msra.mxu0 0.0
        %578 = vmatprep.subr.mxu0 0.0
        %579 = vmatpush1.msra.mxu0 0.0
        %580 = vmatprep.subr.mxu0 0.0
        %581 = vmatpush1.msra.mxu0 0.0
        %582 = vmatprep.subr.mxu0 0.0
        %583 = vmatpush1.msra.mxu0 0.0
        %584 = vmatprep.subr.mxu0 0.0
        %585 = vmatpush1.msra.mxu0 0.0
        %586 = vmatprep.subr.mxu0 0.0
        %587 = vmatpush1.msra.mxu0 0.0
        %588 = vmatprep.subr.mxu0 0.0
        %589 = vmatpush1.msra.mxu0 0.0
        %590 = vmatprep.mubr.f32.mxu0 0.0
        %591 = vmatmul.mubr.f32.gmra.mrb[0].mxu0 %v524
        %v592 = vpop.f32.mrb[0].mxu0
        %v593 = vadd.f32 %v521, %v592
        %v594 = vpop.f32.mrb[0].mxu0
        %595 = vdwg.mxu0
        %597 = vrot.lane.b32.xlu0 %v593, 32
        %v598 = vpop.permute.xlu0 %597
        %vm600 = vcmask 392448
        %601 = vst.msk [vmem:[%s215] sm:$0xff] %vm600, %v598
        %v602 = vld [vmem:[%s3 + $0xc0] sm:$0xff]
        %v603 = vld [vmem:[%s3 + $0xc8] sm:$0xff]
        %v604 = vld [vmem:[%s3 + $0xd0] sm:$0xff]
        %v605 = vld [vmem:[%s3 + $0xd8] sm:$0xff]
        %v606 = vld [vmem:[%s3 + $0xe0] sm:$0xff]
        %v607 = vld [vmem:[%s3 + $0xe8] sm:$0xff]
        %v608 = vld [vmem:[%s3 + $0xf0] sm:$0xff]
        %v609 = vld [vmem:[%s3 + $0xf8] sm:$0xff]
        %v610 = vld [vmem:[%s4] sm:$0x1]
        %v612 = vlaneseq
        %v613 = vshrl.u32 %v612, 7
        %v614 = vsub.s32 0, %v613
        %v615 = vrot.slane %v610, %v614
        %616 = vrot.lane.b32.xlu0 %v317, 64
        %v617 = vpop.permute.xlu0 %616
        %618 = vrot.lane.b32.xlu0 %v615, 80
        %v619 = vpop.permute.xlu0 %618
        %v621 = vsel %vm333, %v617, 0
        %623 = vmatprep.subr.mxu0 0.0
        %624 = vmatpush1.msra.mxu0 %v602
        %625 = vmatprep.subr.mxu0 0.0
        %626 = vmatpush1.msra.mxu0 %v603
        %627 = vmatprep.subr.mxu0 0.0
        %628 = vmatpush1.msra.mxu0 %v604
        %629 = vmatprep.subr.mxu0 0.0
        %630 = vmatpush1.msra.mxu0 %v605
        %631 = vmatprep.subr.mxu0 0.0
        %632 = vmatpush1.msra.mxu0 %v606
        %633 = vmatprep.subr.mxu0 0.0
        %634 = vmatpush1.msra.mxu0 %v607
        %635 = vmatprep.subr.mxu0 0.0
        %636 = vmatpush1.msra.mxu0 %v608
        %637 = vmatprep.subr.mxu0 0.0
        %638 = vmatpush1.msra.mxu0 %v609
        %639 = vmatprep.subr.mxu0 0.0
        %640 = vmatpush1.msra.mxu0 0.0
        %641 = vmatprep.subr.mxu0 0.0
        %642 = vmatpush1.msra.mxu0 0.0
        %643 = vmatprep.subr.mxu0 0.0
        %644 = vmatpush1.msra.mxu0 0.0
        %645 = vmatprep.subr.mxu0 0.0
        %646 = vmatpush1.msra.mxu0 0.0
        %647 = vmatprep.subr.mxu0 0.0
        %648 = vmatpush1.msra.mxu0 0.0
        %649 = vmatprep.subr.mxu0 0.0
        %650 = vmatpush1.msra.mxu0 0.0
        %651 = vmatprep.subr.mxu0 0.0
        %652 = vmatpush1.msra.mxu0 0.0
        %653 = vmatprep.subr.mxu0 0.0
        %654 = vmatpush1.msra.mxu0 0.0
        %655 = vmatprep.subr.mxu0 0.0
        %656 = vmatpush1.msra.mxu0 0.0
        %657 = vmatprep.subr.mxu0 0.0
        %658 = vmatpush1.msra.mxu0 0.0
        %659 = vmatprep.subr.mxu0 0.0
        %660 = vmatpush1.msra.mxu0 0.0
        %661 = vmatprep.subr.mxu0 0.0
        %662 = vmatpush1.msra.mxu0 0.0
        %663 = vmatprep.subr.mxu0 0.0
        %664 = vmatpush1.msra.mxu0 0.0
        %665 = vmatprep.subr.mxu0 0.0
        %666 = vmatpush1.msra.mxu0 0.0
        %667 = vmatprep.subr.mxu0 0.0
        %668 = vmatpush1.msra.mxu0 0.0
        %669 = vmatprep.subr.mxu0 0.0
        %670 = vmatpush1.msra.mxu0 0.0
        %671 = vmatprep.subr.mxu0 0.0
        %672 = vmatpush1.msra.mxu0 0.0
        %673 = vmatprep.subr.mxu0 0.0
        %674 = vmatpush1.msra.mxu0 0.0
        %675 = vmatprep.subr.mxu0 0.0
        %676 = vmatpush1.msra.mxu0 0.0
        %677 = vmatprep.subr.mxu0 0.0
        %678 = vmatpush1.msra.mxu0 0.0
        %679 = vmatprep.subr.mxu0 0.0
        %680 = vmatpush1.msra.mxu0 0.0
        %681 = vmatprep.subr.mxu0 0.0
        %682 = vmatpush1.msra.mxu0 0.0
        %683 = vmatprep.subr.mxu0 0.0
        %684 = vmatpush1.msra.mxu0 0.0
        %685 = vmatprep.subr.mxu0 0.0
        %686 = vmatpush1.msra.mxu0 0.0
        %687 = vmatprep.mubr.f32.mxu0 0.0
        %688 = vmatmul.mubr.f32.gmra.mrb[0].mxu0 %v621
        %v689 = vpop.f32.mrb[0].mxu0
        %v690 = vadd.f32 %v619, %v689
        %v691 = vpop.f32.mrb[0].mxu0
        %692 = vdwg.mxu0
        %694 = vrot.lane.b32.xlu0 %v690, 48
        %v695 = vpop.permute.xlu0 %694
        %vm697 = vcmask 523648
        %698 = vst.msk [vmem:[%s215] sm:$0xff] %vm697, %v695
        %s699 = sand.u32 %s137, 1
        %s700 = scalar_lea.sflag [#allocation3], %s699
        %s701 = sand.u32 %s137, 1
        %s702 = smul.addr %s701, 8
        %s703 = scalar_lea.vmem [#allocation2], %s702
        // Predicated region
        $region41: #{tpu_custom_call.1} parent=39 // pred_check
          %p704 = pneg %p147
        $region42: #{tpu_custom_call.1} parent=39 // pred_check_branch
          %706 = sbr.rel (%p704) target = $region44
        $region43: #{tpu_custom_call.1} parent=39 // pred_region
          %s708 = ssub.s32 128, 128
          %709 = vsyncadd %s700, %s708
          %s710 = smul.addr %s19, 128
          %s711 = scalar_lea.hbm %s5, %s710
          %s713 = sshll.u32 %s703, 4
          %s714 = int_to_ptr.vmem [resolvable:$true] %s713
          %716 = dma.vmem_to_hbm [thread:$0]  %s714, 128, %s711, %s700
        $region44: #{tpu_custom_call.1} parent=39 // pred_fallthru
          _
      $region40: #{tpu_custom_call.1} parent=5 // pred_fallthru
        _
      %p717 = scmp.le.s32.totalorder 2, %s14
      // Predicated region
      $region45: #{tpu_custom_call.1} parent=5 // pred_check
        %p718 = pneg %p717
      $region46: #{tpu_custom_call.1} parent=5 // pred_check_branch
        %720 = sbr.rel (%p718) target = $region48
      $region47: #{tpu_custom_call.1} parent=5 // pred_region
        %s721 = ssub.s32 %s14, 2
        // Predicated region
        $region49: #{tpu_custom_call.1} parent=47 // pred_check
          %p722 = pneg %p153
        $region50: #{tpu_custom_call.1} parent=47 // pred_check_branch
          %724 = sbr.rel (%p722) target = $region52
        $region51: #{tpu_custom_call.1} parent=47 // pred_region
          %s725 = sand.u32 %s138, 1
          %s726 = scalar_lea.sflag [#allocation3], %s725
          %s727 = sand.u32 %s138, 1
          %s728 = smul.addr %s727, 8
          %s729 = scalar_lea.vmem [#allocation2], %s728
          %730 = dma.done %s726, 128
        $region52: #{tpu_custom_call.1} parent=47 // pred_fallthru
          _
      $region48: #{tpu_custom_call.1} parent=5 // pred_fallthru
        _
    $region6: #{tpu_custom_call.1} parent=1 // loop_footer
      %s18 = sadd.s32 1, %s14
    $region7: #{tpu_custom_call.1} parent=1 // loop_footer_branch
      %13 = sbr.rel target = $region3
    $region8: #{tpu_custom_call.1} parent=1 // loop_exit
      _
    %731 = vsyncpa [#allocation3], 1
    %s732 = scalar_lea.sflag [#allocation3], 1
    %733 = vsyncpa %s732, 1

</llo_original>
